<compile_context>
chip_gen: v6e
topology: v6e:2x2x1
jax: 0.10.0
libtpu: 0.0.40
codegen_flags: <defaults>
</compile_context>

<pallas_src>
import jax
import jax.numpy as jnp
import numpy as np
from jax.experimental import pallas as pl
from jax.experimental.pallas import tpu as pltpu

LANE = 128  # TPU lane width; class dim padded to a multiple of this.


def roi_classifier_kernel(patches_ref, w_fused_ref, b_fused_ref, out_ref):
    """Fused backbone.encode_image + linear-probe fc over the whole batch.

    patches_ref : (B, Np, Cpp)  flattened patches of all images (f32)
    w_fused_ref : (Cpp, NCp)    folded weight  We @ Wf_pad
    b_fused_ref : (1, NCp)      folded bias    be @ Wf_pad + bf_pad
    out_ref     : (B, NCp)      lane-dense padded logits
    """
    inv_np = 1.0 / patches_ref.shape[1]
    # Mean-pool BEFORE the matmul (exact up to fp32 reordering): sublane/XLU
    # reduce over patches instead of Np extra MXU rows.
    mean_p = jnp.sum(patches_ref[...], axis=1) * inv_np            # (B, Cpp)
    # Single fused matmul (patch-embed composed with fc) + one bias add.
    out_ref[...] = (
        jnp.dot(mean_p, w_fused_ref[...], preferred_element_type=jnp.float32)
        + b_fused_ref[...]
    )


def image_to_patches(x, patch):
    """NCHW image -> [B, Np, C*P*P] patches (C, ph, pw flattening order)."""
    B, C, H, W = x.shape
    Hp, Wp = H // patch, W // patch
    x = x.reshape(B, C, Hp, patch, Wp, patch)
    x = x.transpose(0, 2, 4, 1, 3, 5)  # B, Hp, Wp, C, ph, pw
    return x.reshape(B, Hp * Wp, C * patch * patch)


def fuse_params(params, num_classes):
    """Fold (patch-embed linear) o (fc linear) into one Cpp x NCp linear.

    Valid because only logits are returned.  Class dim is zero-padded to a
    multiple of 128 for lane-dense stores.
    """
    we, be, wf, bf = params
    D, NC = wf.shape
    assert NC == num_classes
    nc_pad = pl.cdiv(NC, LANE) * LANE
    wf_pad = jnp.zeros((D, nc_pad), jnp.float32).at[:, :NC].set(wf)
    bf_pad = jnp.zeros((nc_pad,), jnp.float32).at[:NC].set(bf)
    w_fused = we @ wf_pad                                   # (Cpp, nc_pad)
    b_fused = (be @ wf_pad + bf_pad).reshape(1, nc_pad)     # (1, nc_pad)
    return w_fused, b_fused


def roi_classifier_forward(x, fused_params, patch, num_classes):
    """Forward pass of ROIClassifier (linear_probe) on NCHW images."""
    w_fused, b_fused = fused_params
    patches = image_to_patches(x.astype(jnp.float32), patch)  # (B, Np, Cpp)
    B = patches.shape[0]
    nc_pad = w_fused.shape[1]

    # No grid: one invocation over the whole batch; full arrays are VMEM blocks.
    logits_pad = pl.pallas_call(
        roi_classifier_kernel,
        out_shape=jax.ShapeDtypeStruct((B, nc_pad), jnp.float32),
        in_specs=[
            pl.BlockSpec(memory_space=pltpu.MemorySpace.VMEM),  # patches
            pl.BlockSpec(memory_space=pltpu.MemorySpace.VMEM),  # fused weight
            pl.BlockSpec(memory_space=pltpu.MemorySpace.VMEM),  # fused bias
        ],
        out_specs=pl.BlockSpec(memory_space=pltpu.MemorySpace.VMEM),
    )(patches, w_fused, b_fused)

    return logits_pad[:, :num_classes]


def init_params(key, cpp, output_dim, num_classes):
    """Deterministic synthetic parameters (no checkpoint load)."""
    k1, k2, k3, k4 = jax.random.split(key, 4)
    we = jax.random.normal(k1, (cpp, output_dim), jnp.float32) / np.sqrt(cpp)
    be = jax.random.normal(k2, (output_dim,), jnp.float32) * 0.01
    wf = jax.random.normal(k3, (output_dim, num_classes), jnp.float32) / np.sqrt(output_dim)
    bf = jax.random.normal(k4, (num_classes,), jnp.float32) * 0.01
    return we, be, wf, bf


def reference_forward(x, params, patch):
    """Pure-JAX reference with the ORIGINAL module math order."""
    we, be, wf, bf = params
    patches = image_to_patches(x.astype(jnp.float32), patch)
    emb = jnp.einsum("bnc,cd->bnd", patches, we) + be[None, None, :]
    feat = jnp.mean(emb, axis=1)                  # backbone.encode_image(x)
    return feat @ wf + bf[None, :]                # self.fc(features)


if __name__ == "__main__":
    # Small shapes consistent with the module's forward:
    #   x: NCHW image batch, backbone.output_dim=32, num_classes=10
    B, C, H, W = 2, 4, 16, 16
    PATCH = 8
    OUTPUT_DIM = 32
    NUM_CLASSES = 10
    CPP = C * PATCH * PATCH  # flattened patch dim = 256

    key = jax.random.PRNGKey(0)
    kx, kp = jax.random.split(key)
    x = jax.random.normal(kx, (B, C, H, W), jnp.float32)
    params = init_params(kp, CPP, OUTPUT_DIM, NUM_CLASSES)

    # Static params -> fold once, outside the per-example forward.
    fused_params = fuse_params(params, NUM_CLASSES)

    logits = roi_classifier_forward(x, fused_params, PATCH, NUM_CLASSES)
    logits = jax.block_until_ready(logits)

    ref = reference_forward(x, params, PATCH)
    # Tolerance accounts for fp32 re-association from the mean-hoist / weight-fold.
    np.testing.assert_allclose(np.asarray(logits), np.asarray(ref), rtol=1e-4, atol=1e-4)

    # TODO(synk): 'mlp_probe' head (Linear->GELU->Linear) and a real pretrained
    # backbone are not modeled; only the default linear_probe path is fused here.
    print("KERNEL_OK")
</pallas_src>

<mosaic_0001>
module attributes {stable_mosaic.version = 11 : i64} {
  func.func @roi_classifier_kernel(%arg0: memref<2x4x256xf32, #tpu.memory_space<vmem>>, %arg1: memref<256x128xf32, #tpu.memory_space<vmem>>, %arg2: memref<1x128xf32, #tpu.memory_space<vmem>>, %arg3: memref<2x128xf32, #tpu.memory_space<vmem>>) attributes {dimension_semantics = [], scalar_prefetch = 0 : i64, scratch_operands = 0 : i64, tpu.core_type = #tpu.core_type<tc>} {
    %c0 = arith.constant 0 : index
    %c0_0 = arith.constant 0 : index
    %c0_1 = arith.constant 0 : index
    %0 = vector.load %arg0[%c0, %c0_0, %c0_1] : memref<2x4x256xf32, #tpu.memory_space<vmem>>, vector<2x4x256xf32>
    %cst = arith.constant dense<0.000000e+00> : vector<2x256xf32>
    %1 = vector.multi_reduction <add>, %0, %cst [1] : vector<2x4x256xf32> to vector<2x256xf32>
    %cst_2 = arith.constant 2.500000e-01 : f32
    %2 = vector.broadcast %cst_2 : f32 to vector<2x256xf32>
    %3 = arith.mulf %1, %2 : vector<2x256xf32>
    %c0_3 = arith.constant 0 : index
    %c0_4 = arith.constant 0 : index
    %4 = vector.load %arg1[%c0_3, %c0_4] : memref<256x128xf32, #tpu.memory_space<vmem>>, vector<256x128xf32>
    %cst_5 = arith.constant dense<0.000000e+00> : vector<2x128xf32>
    %5 = tpu.matmul %3, %4, %cst_5 {dimension_numbers = #tpu.dot_dimension_numbers<[1], [0], [0], [1], [0, 0, 1, 1], [], []>} : vector<2x256xf32>, vector<256x128xf32>, vector<2x128xf32> -> vector<2x128xf32>
    %c0_6 = arith.constant 0 : index
    %c0_7 = arith.constant 0 : index
    %6 = vector.load %arg2[%c0_6, %c0_7] : memref<1x128xf32, #tpu.memory_space<vmem>>, vector<1x128xf32>
    %7 = vector.broadcast %6 : vector<1x128xf32> to vector<2x128xf32>
    %8 = arith.addf %5, %7 : vector<2x128xf32>
    %c0_8 = arith.constant 0 : index
    %c0_9 = arith.constant 0 : index
    %9 = vector.load %arg3[%c0_8, %c0_9] : memref<2x128xf32, #tpu.memory_space<vmem>>, vector<2x128xf32>
    tpu.vector_store %arg3[%c0_8, %c0_9], %8 {strides = array<i32>} : memref<2x128xf32, #tpu.memory_space<vmem>>, vector<2x128xf32>,
    return
  }
}

</mosaic_0001>

<llo_original>
// kernel: tpu_custom_call.1
$region0: #{tpu_custom_call.1}
  #allocation0 [shape = 'u32[]', space=smem, size = 0x4, offset = 0x4, fixed_abs, tag = 'smem constant byte address 0x4 - core index']
  #allocation1 [shape = 'u32[144,128]{1,0:T(1,128)}', space=vmem, size = 0x12000, scoped, tag = 'internal scratch']
  %s0 = inlined_call_operand.hbm [shape: f32[2,4,256], index: 0, kind: input, shape index: {}]
  %s1 = inlined_call_operand.hbm [shape: f32[256,128], index: 1, kind: input, shape index: {}]
  %s2 = inlined_call_operand.vmem [shape: f32[1,128], index: 2, kind: input, shape index: {}]
  %s3 = inlined_call_operand.hbm [shape: f32[2,128], index: 3, kind: output, shape index: {}]
  %s4 = sld [smem:[#allocation0]]
  $region30: #{tpu_custom_call.1} parent=0
    _
  %s6 = ssub.s32 1, %s4
  %s7 = scalar_select 0, %s6, %s4
  $region1: #{tpu_custom_call.1} parent=0
    #allocation2 [shape = 'u8[8192]{0}', space=vmem, size = 0x2000, scoped, tag = 'input window, operand 0, single buffered']
    #allocation3 [shape = 's32[1]{0}', space=sflag, size = 0x4, scoped, tag = 'scoped memory for tpu_custom_call.1']
    #allocation4 [shape = 's32[1]{0}', space=sflag, size = 0x4, scoped, tag = 'scoped memory for tpu_custom_call.1']
    #allocation5 [shape = 'u8[131072]{0}', space=vmem, size = 0x20000, scoped, tag = 'input window, operand 1, single buffered']
    #allocation6 [shape = 's32[1]{0}', space=sflag, size = 0x4, scoped, tag = 'scoped memory for tpu_custom_call.1']
    #allocation7 [shape = 'u8[1024]{0}', space=vmem, size = 0x400, scoped, tag = 'output window, operand 0, single buffered']
    %8 = vsyncpa [#allocation3], 0
    %9 = vsyncpa [#allocation6], 0
    %10 = vsyncpa [#allocation4], 0
    // Predicated region
    $region2: #{tpu_custom_call.1} parent=1 // pred_check
      _
    $region3: #{tpu_custom_call.1} parent=1 // pred_check_branch
      %12 = sbr.rel (0) target = $region5
    $region4: #{tpu_custom_call.1} parent=1 // pred_region
      %s14 = ssub.s32 256, 256
      %15 = vsyncadd [#allocation3], %s14
      %s16 = sshll.u32 [#allocation2], 4
      %s17 = int_to_ptr.vmem [resolvable:$true] %s16
      %22 = dma.hbm_to_vmem [thread:$0]  %s0, 256, %s17, [#allocation3], 128, 128, 8
    $region5: #{tpu_custom_call.1} parent=1 // pred_fallthru
      _
    // Predicated region
    $region6: #{tpu_custom_call.1} parent=1 // pred_check
      _
    $region7: #{tpu_custom_call.1} parent=1 // pred_check_branch
      %24 = sbr.rel (0) target = $region9
    $region8: #{tpu_custom_call.1} parent=1 // pred_region
      %s26 = ssub.s32 4096, 4096
      %27 = vsyncadd [#allocation6], %s26
      %s28 = sshll.u32 [#allocation5], 4
      %s29 = int_to_ptr.vmem [resolvable:$true] %s28
      %34 = dma.hbm_to_vmem [thread:$0]  %s1, 4096, %s29, [#allocation6], 128, 128, 8
    $region9: #{tpu_custom_call.1} parent=1 // pred_fallthru
      _
    // Predicated region
    $region10: #{tpu_custom_call.1} parent=1 // pred_check
      _
    $region11: #{tpu_custom_call.1} parent=1 // pred_check_branch
      %36 = sbr.rel (0) target = $region13
    $region12: #{tpu_custom_call.1} parent=1 // pred_region
      _
    $region13: #{tpu_custom_call.1} parent=1 // pred_fallthru
      _
    // Predicated region
    $region14: #{tpu_custom_call.1} parent=1 // pred_check
      _
    $region15: #{tpu_custom_call.1} parent=1 // pred_check_branch
      %38 = sbr.rel (0) target = $region17
    $region16: #{tpu_custom_call.1} parent=1 // pred_region
      %39 = dma.done [#allocation3], 256
    $region17: #{tpu_custom_call.1} parent=1 // pred_fallthru
      _
    // Predicated region
    $region18: #{tpu_custom_call.1} parent=1 // pred_check
      _
    $region19: #{tpu_custom_call.1} parent=1 // pred_check_branch
      %41 = sbr.rel (0) target = $region21
    $region20: #{tpu_custom_call.1} parent=1 // pred_region
      %42 = dma.done [#allocation6], 4096
    $region21: #{tpu_custom_call.1} parent=1 // pred_fallthru
      _
    %v43 = vld [vmem:[#allocation2] sm:$0xff]
    %v44 = vld [vmem:[#allocation2 + $0x8] sm:$0xff]
    %v47 = vcombine.high %v43, %v43
    %v48 = vcombine.high %v44, %v44
    %vm51 = vcmask 1043456
    %v52 = vsel %vm51, %v43, 0.0
    %v53 = vrot.slane %v52, 4
    %v54 = vadd.f32 %v52, %v53
    %v55 = vrot.slane %v54, 2
    %v56 = vadd.f32 %v54, %v55
    %v57 = vrot.slane %v56, 1
    %v58 = vadd.f32 %v56, %v57
    %v59 = vsel %vm51, %v47, 0.0
    %v60 = vrot.slane %v59, 4
    %v61 = vadd.f32 %v59, %v60
    %v62 = vrot.slane %v61, 2
    %v63 = vadd.f32 %v61, %v62
    %v64 = vrot.slane %v63, 1
    %v65 = vadd.f32 %v63, %v64
    %v66 = vsel %vm51, %v44, 0.0
    %v67 = vrot.slane %v66, 4
    %v68 = vadd.f32 %v66, %v67
    %v69 = vrot.slane %v68, 2
    %v70 = vadd.f32 %v68, %v69
    %v71 = vrot.slane %v70, 1
    %v72 = vadd.f32 %v70, %v71
    %v73 = vsel %vm51, %v48, 0.0
    %v74 = vrot.slane %v73, 4
    %v75 = vadd.f32 %v73, %v74
    %v76 = vrot.slane %v75, 2
    %v77 = vadd.f32 %v75, %v76
    %v78 = vrot.slane %v77, 1
    %v79 = vadd.f32 %v77, %v78
    %v80 = vmul.f32 %v58, 0.25
    %v81 = vmul.f32 %v65, 0.25
    %v82 = vmul.f32 %v72, 0.25
    %v83 = vmul.f32 %v79, 0.25
    %v84 = vld [vmem:[#allocation5] sm:$0xff]
    %v85 = vld [vmem:[#allocation5 + $0x8] sm:$0xff]
    %v86 = vld [vmem:[#allocation5 + $0x10] sm:$0xff]
    %v87 = vld [vmem:[#allocation5 + $0x18] sm:$0xff]
    %v88 = vld [vmem:[#allocation5 + $0x20] sm:$0xff]
    %v89 = vld [vmem:[#allocation5 + $0x28] sm:$0xff]
    %v90 = vld [vmem:[#allocation5 + $0x30] sm:$0xff]
    %v91 = vld [vmem:[#allocation5 + $0x38] sm:$0xff]
    %v92 = vld [vmem:[#allocation5 + $0x40] sm:$0xff]
    %v93 = vld [vmem:[#allocation5 + $0x48] sm:$0xff]
    %v94 = vld [vmem:[#allocation5 + $0x50] sm:$0xff]
    %v95 = vld [vmem:[#allocation5 + $0x58] sm:$0xff]
    %v96 = vld [vmem:[#allocation5 + $0x60] sm:$0xff]
    %v97 = vld [vmem:[#allocation5 + $0x68] sm:$0xff]
    %v98 = vld [vmem:[#allocation5 + $0x70] sm:$0xff]
    %v99 = vld [vmem:[#allocation5 + $0x78] sm:$0xff]
    %v100 = vld [vmem:[#allocation5 + $0x80] sm:$0xff]
    %v101 = vld [vmem:[#allocation5 + $0x88] sm:$0xff]
    %v102 = vld [vmem:[#allocation5 + $0x90] sm:$0xff]
    %v103 = vld [vmem:[#allocation5 + $0x98] sm:$0xff]
    %v104 = vld [vmem:[#allocation5 + $0xa0] sm:$0xff]
    %v105 = vld [vmem:[#allocation5 + $0xa8] sm:$0xff]
    %v106 = vld [vmem:[#allocation5 + $0xb0] sm:$0xff]
    %v107 = vld [vmem:[#allocation5 + $0xb8] sm:$0xff]
    %v108 = vld [vmem:[#allocation5 + $0xc0] sm:$0xff]
    %v109 = vld [vmem:[#allocation5 + $0xc8] sm:$0xff]
    %v110 = vld [vmem:[#allocation5 + $0xd0] sm:$0xff]
    %v111 = vld [vmem:[#allocation5 + $0xd8] sm:$0xff]
    %v112 = vld [vmem:[#allocation5 + $0xe0] sm:$0xff]
    %v113 = vld [vmem:[#allocation5 + $0xe8] sm:$0xff]
    %v114 = vld [vmem:[#allocation5 + $0xf0] sm:$0xff]
    %v115 = vld [vmem:[#allocation5 + $0xf8] sm:$0xff]
    %v116 = vld [vmem:[%s2] sm:$0x1]
    %v118 = vlaneseq
    %v119 = vshrl.u32 %v118, 7
    %v120 = vsub.s32 0, %v119
    %v121 = vrot.slane %v116, %v120
    %vm127 = vcmask 1041409
    %v128 = vsel %vm127, %v82, %v80
    %v129 = vsel %vm127, %v83, %v81
    %132 = vmatprep.subr.mxu0 0.0
    %133 = vmatpush1.msra.mxu0 %v99
    %134 = vmatprep.subr.mxu0 0.0
    %135 = vmatpush1.msra.mxu0 %v98
    %136 = vmatprep.subr.mxu0 0.0
    %137 = vmatpush1.msra.mxu0 %v97
    %138 = vmatprep.subr.mxu0 0.0
    %139 = vmatpush1.msra.mxu0 %v96
    %140 = vmatprep.subr.mxu0 0.0
    %141 = vmatpush1.msra.mxu0 %v95
    %142 = vmatprep.subr.mxu0 0.0
    %143 = vmatpush1.msra.mxu0 %v94
    %144 = vmatprep.subr.mxu0 0.0
    %145 = vmatpush1.msra.mxu0 %v93
    %146 = vmatprep.subr.mxu0 0.0
    %147 = vmatpush1.msra.mxu0 %v92
    %148 = vmatprep.subr.mxu0 0.0
    %149 = vmatpush1.msra.mxu0 %v91
    %150 = vmatprep.subr.mxu0 0.0
    %151 = vmatpush1.msra.mxu0 %v90
    %152 = vmatprep.subr.mxu0 0.0
    %153 = vmatpush1.msra.mxu0 %v89
    %154 = vmatprep.subr.mxu0 0.0
    %155 = vmatpush1.msra.mxu0 %v88
    %156 = vmatprep.subr.mxu0 0.0
    %157 = vmatpush1.msra.mxu0 %v87
    %158 = vmatprep.subr.mxu0 0.0
    %159 = vmatpush1.msra.mxu0 %v86
    %160 = vmatprep.subr.mxu0 0.0
    %161 = vmatpush1.msra.mxu0 %v85
    %162 = vmatprep.subr.mxu0 0.0
    %163 = vmatpush1.msra.mxu0 %v84
    %164 = vmatprep.subr.mxu0 0.0
    %165 = vmatpush2.msra.mxu0 %v115
    %166 = vmatprep.subr.mxu0 0.0
    %167 = vmatpush2.msra.mxu0 %v114
    %168 = vmatprep.subr.mxu0 0.0
    %169 = vmatpush2.msra.mxu0 %v113
    %170 = vmatprep.subr.mxu0 0.0
    %171 = vmatpush2.msra.mxu0 %v112
    %172 = vmatprep.subr.mxu0 0.0
    %173 = vmatpush2.msra.mxu0 %v111
    %174 = vmatprep.subr.mxu0 0.0
    %175 = vmatpush2.msra.mxu0 %v110
    %176 = vmatprep.subr.mxu0 0.0
    %177 = vmatpush2.msra.mxu0 %v109
    %178 = vmatprep.subr.mxu0 0.0
    %179 = vmatpush2.msra.mxu0 %v108
    %180 = vmatprep.subr.mxu0 0.0
    %181 = vmatpush2.msra.mxu0 %v107
    %182 = vmatprep.subr.mxu0 0.0
    %183 = vmatpush2.msra.mxu0 %v106
    %184 = vmatprep.subr.mxu0 0.0
    %185 = vmatpush2.msra.mxu0 %v105
    %186 = vmatprep.subr.mxu0 0.0
    %187 = vmatpush2.msra.mxu0 %v104
    %188 = vmatprep.subr.mxu0 0.0
    %189 = vmatpush2.msra.mxu0 %v103
    %190 = vmatprep.subr.mxu0 0.0
    %191 = vmatpush2.msra.mxu0 %v102
    %192 = vmatprep.subr.mxu0 0.0
    %193 = vmatpush2.msra.mxu0 %v101
    %194 = vmatprep.subr.mxu0 0.0
    %195 = vmatpush2.msra.mxu0 %v100
    %196 = vmatprep.mubr.f32.mxu0 %v129
    %197 = vmatmul.mubr.f32.gmra.mxu0 %v128
    %v198 = vpop.f32.mrf.mxu0
    %v199 = vadd.f32 %v121, %v198
    %v200 = vpop.f32.mrf.mxu0
    %201 = vdwg.mxu0
    %202 = vst [vmem:[#allocation7] sm:$0x3] %v199
    // Predicated region
    $region22: #{tpu_custom_call.1} parent=1 // pred_check
      _
    $region23: #{tpu_custom_call.1} parent=1 // pred_check_branch
      %204 = sbr.rel (0) target = $region25
    $region24: #{tpu_custom_call.1} parent=1 // pred_region
      %s206 = ssub.s32 32, 32
      %207 = vsyncadd [#allocation4], %s206
      %s209 = sshll.u32 [#allocation7], 4
      %s210 = int_to_ptr.vmem [resolvable:$true] %s209
      %212 = dma.vmem_to_hbm [thread:$0]  %s210, 32, %s3, [#allocation4]
    $region25: #{tpu_custom_call.1} parent=1 // pred_fallthru
      _
    // Predicated region
    $region26: #{tpu_custom_call.1} parent=1 // pred_check
      _
    $region27: #{tpu_custom_call.1} parent=1 // pred_check_branch
      %214 = sbr.rel (0) target = $region29
    $region28: #{tpu_custom_call.1} parent=1 // pred_region
      %215 = dma.done [#allocation4], 32
    $region29: #{tpu_custom_call.1} parent=1 // pred_fallthru
      _
    %216 = vsyncpa [#allocation3], 1
    %217 = vsyncpa [#allocation6], 1
    %218 = vsyncpa [#allocation4], 1

</llo_original>
